<compile_context>
chip_gen: v5e
topology: v5e:2x2
jax: 0.10.0
libtpu: 0.0.40
codegen_flags: <defaults>
</compile_context>

<pallas_src>
import functools

import jax
import jax.numpy as jnp
from jax.experimental import pallas as pl
from jax.experimental.pallas import tpu as pltpu

BN_EPS = 1e-5


def _fused_conv_relu_bn_kernel(x_ref, w_ref, g_ref, b_ref, y_ref, *,
                               n, h, w, cout, kh_taps, apply_relu, apply_bn):
    """Conv (KH banded matmuls, batch folded into M) + ReLU + training-mode BN.

    x_ref : (N, Hp, Wp*Cin)        bf16 padded image (single resident block)
    w_ref : (KH, Wp*Cin, W*Cout)   bf16 banded weight
    g_ref : (1, Cout)              f32 BN gamma
    b_ref : (1, Cout)              f32 BN beta
    y_ref : (N*H, W*Cout)          f32 output (lane dense, 128-wide stores)
    """
    wpcin = x_ref.shape[-1]
    wcout = y_ref.shape[-1]
    m = n * h

    xv = x_ref[...]                                        # (N, Hp, Wp*Cin) bf16
    acc = jnp.zeros((m, wcout), jnp.float32)
    for k in range(kh_taps):                               # static, fully unrolled
        # Slice the tap window and merge leading dims -> (N*H, Wp*Cin). H is a
        # multiple of the bf16 sublane tile, so the merge is layout-trivial.
        rows = xv[:, k:k + h, :].reshape(m, wpcin)
        acc = acc + jnp.dot(rows, w_ref[k], preferred_element_type=jnp.float32)

    if apply_relu:
        acc = jnp.maximum(acc, 0.0)

    if apply_bn:
        # Per-channel batch statistics. Lanes are (w, cout)-interleaved; fold the
        # W groups per channel with a tiny selection matrix (MXU), avoiding any
        # lane-dim reshape/concatenate.
        row_id = jax.lax.broadcasted_iota(jnp.int32, (wcout, cout), 0)
        col_id = jax.lax.broadcasted_iota(jnp.int32, (wcout, cout), 1)
        sel = (row_id % cout == col_id).astype(jnp.float32)        # (W*Cout, Cout)
        row_t = jax.lax.broadcasted_iota(jnp.int32, (cout, wcout), 0)
        col_t = jax.lax.broadcasted_iota(jnp.int32, (cout, wcout), 1)
        sel_t = (col_t % cout == row_t).astype(jnp.float32)        # (Cout, W*Cout)

        lane_sum = jnp.sum(acc, axis=0, keepdims=True)             # (1, W*Cout)
        lane_sq = jnp.sum(acc * acc, axis=0, keepdims=True)        # (1, W*Cout)
        inv_count = 1.0 / float(m * w)
        mean = jnp.dot(lane_sum, sel, preferred_element_type=jnp.float32) * inv_count
        ex2 = jnp.dot(lane_sq, sel, preferred_element_type=jnp.float32) * inv_count
        # TODO(synk): E[x^2]-mean^2 cancels for large counts; use Welford at scale.
        var = jnp.maximum(ex2 - mean * mean, 0.0)                  # biased variance
        inv_std = jax.lax.rsqrt(var + BN_EPS)
        scale_c = g_ref[...] * inv_std                             # (1, Cout)
        shift_c = b_ref[...] - mean * scale_c
        # Broadcast per-channel scale/shift back to the (w, cout) lane layout.
        scale = jnp.dot(scale_c, sel_t, preferred_element_type=jnp.float32)
        shift = jnp.dot(shift_c, sel_t, preferred_element_type=jnp.float32)
        acc = acc * scale + shift

    y_ref[...] = acc.astype(y_ref.dtype)


def _banded_weight(weight_oihw, W, padding):
    """Expand (Cout, Cin, KH, KW) conv weights into (KH, Wp*Cin, W*Cout) banded form.

    Wmat[kh, wi*Cin + ci, w*Cout + co] = weight[co, ci, kh, wi - w] if 0 <= wi-w < KW else 0
    """
    Cout, Cin, KH, KW = weight_oihw.shape
    Wp = W + 2 * padding
    w_t = jnp.transpose(weight_oihw, (2, 3, 1, 0))          # (KH, KW, Cin, Cout)
    kw = jnp.arange(Wp)[:, None] - jnp.arange(W)[None, :]   # (Wp, W)
    valid = (kw >= 0) & (kw < KW)
    kw_c = jnp.clip(kw, 0, KW - 1)
    wm = w_t[:, kw_c]                                       # (KH, Wp, W, Cin, Cout)
    wm = jnp.where(valid[None, :, :, None, None], wm, 0.0)
    wm = jnp.transpose(wm, (0, 1, 3, 2, 4))                 # (KH, Wp, Cin, W, Cout)
    return wm.reshape(KH, Wp * Cin, W * Cout)


def conv_relu_2d(x_nchw, weight_oihw, gamma, beta, *, padding=1,
                 is_relu=True, is_bn=True):
    """Equivalent of ConvRelu2d.forward (stride=1, dilation=1, groups=1, no conv bias)."""
    N, Cin, H, W = x_nchw.shape
    Cout, Cin_w, KH, KW = weight_oihw.shape
    assert Cin == Cin_w, "groups != 1 not supported"

    Hp, Wp = H + 2 * padding, W + 2 * padding
    assert Hp - (KH - 1) == H and Wp - (KW - 1) == W, "only 'same'-style 3x3/pad=1 supported"

    wp_cin = Wp * Cin
    w_cout = W * Cout                    # lane-dense output width (= 128 at test shape)

    # Layout glue; only exists because the public interface is NCHW.
    x_nhwc = jnp.transpose(x_nchw, (0, 2, 3, 1))
    xp = jnp.pad(x_nhwc, ((0, 0), (padding, padding), (padding, padding), (0, 0)))
    x_lane = xp.reshape(N, Hp, wp_cin).astype(jnp.bfloat16)
    w_band = _banded_weight(weight_oihw, W, padding).astype(jnp.bfloat16)
    gamma2 = gamma.reshape(1, Cout).astype(jnp.float32)
    beta2 = beta.reshape(1, Cout).astype(jnp.float32)

    kern = functools.partial(
        _fused_conv_relu_bn_kernel,
        n=N, h=H, w=W, cout=Cout, kh_taps=KH,
        apply_relu=is_relu, apply_bn=is_bn)

    y_lane = pl.pallas_call(
        kern,
        grid=(1,),
        in_specs=[
            pl.BlockSpec((N, Hp, wp_cin), lambda i: (0, 0, 0)),        # whole image
            pl.BlockSpec((KH, wp_cin, w_cout), lambda i: (0, 0, 0)),   # banded weight
            pl.BlockSpec((1, Cout), lambda i: (0, 0)),                 # gamma
            pl.BlockSpec((1, Cout), lambda i: (0, 0)),                 # beta
        ],
        out_specs=pl.BlockSpec((N * H, w_cout), lambda i: (0, 0)),
        out_shape=jax.ShapeDtypeStruct((N * H, w_cout), jnp.float32),
        compiler_params=pltpu.CompilerParams(
            dimension_semantics=("arbitrary",),
            vmem_limit_bytes=32 * 1024 * 1024,
        ),
    )(x_lane, w_band, gamma2, beta2)

    out_nhwc = y_lane.reshape(N, H, W, Cout)
    return jnp.transpose(out_nhwc, (0, 3, 1, 2))             # back to NCHW


def _reference(x_nchw, weight_oihw, gamma, beta, *, padding=1):
    """Pure-JAX reference (lax conv, f32) mirroring the PyTorch forward."""
    y = jax.lax.conv_general_dilated(
        x_nchw, weight_oihw,
        window_strides=(1, 1),
        padding=[(padding, padding), (padding, padding)],
        dimension_numbers=("NCHW", "OIHW", "NCHW"),
    )
    y = jnp.maximum(y, 0.0)
    mean = jnp.mean(y, axis=(0, 2, 3), keepdims=True)
    var = jnp.mean((y - mean) ** 2, axis=(0, 2, 3), keepdims=True)
    y = (y - mean) * jax.lax.rsqrt(var + BN_EPS)
    return y * gamma.reshape(1, -1, 1, 1) + beta.reshape(1, -1, 1, 1)


if __name__ == "__main__":
    key = jax.random.PRNGKey(0)
    k_x, k_w, k_g, k_b = jax.random.split(key, 4)

    N, Cin, H, W = 2, 4, 16, 16
    Cout, KH, KW = 8, 3, 3

    x = jax.random.normal(k_x, (N, Cin, H, W), jnp.float32)
    # Conv2d weight (bias=False): (out_channels, in_channels, 3, 3)
    weight = jax.random.normal(k_w, (Cout, Cin, KH, KW), jnp.float32) * 0.1
    # BatchNorm2d affine params.
    gamma = 1.0 + 0.1 * jax.random.normal(k_g, (Cout,), jnp.float32)
    beta = 0.1 * jax.random.normal(k_b, (Cout,), jnp.float32)

    out = conv_relu_2d(x, weight, gamma, beta, padding=1, is_relu=True, is_bn=True)
    out = jax.block_until_ready(out)

    ref = _reference(x, weight, gamma, beta, padding=1)
    assert out.shape == (N, Cout, H, W)
    # bf16 MXU operands (f32 accumulation) vs. the all-f32 lax reference -> loosened tol.
    assert jnp.allclose(out, ref, atol=5e-2, rtol=5e-2), (
        "mismatch vs reference: max abs err = "
        f"{float(jnp.max(jnp.abs(out - ref)))}")

    print("KERNEL_OK")
</pallas_src>

<mosaic_0001>
module attributes {stable_mosaic.version = 11 : i64} {
  func.func @_fused_conv_relu_bn_kernel(%arg0: i32, %arg1: memref<2x18x72xbf16, #tpu.memory_space<vmem>>, %arg2: memref<3x72x128xbf16, #tpu.memory_space<vmem>>, %arg3: memref<1x8xf32, #tpu.memory_space<vmem>>, %arg4: memref<1x8xf32, #tpu.memory_space<vmem>>, %arg5: memref<32x128xf32, #tpu.memory_space<vmem>>) attributes {dimension_semantics = [#tpu.dimension_semantics<arbitrary>], iteration_bounds = array<i64: 1>, scalar_prefetch = 0 : i64, scratch_operands = 0 : i64, tpu.core_type = #tpu.core_type<tc>, window_params = [{pipeline_mode = #tpu.pipeline_mode<synchronous>, transform_indices = @transform_0, window_bounds = array<i64: 2, 18, 72>}, {pipeline_mode = #tpu.pipeline_mode<synchronous>, transform_indices = @transform_1, window_bounds = array<i64: 3, 72, 128>}, {pipeline_mode = #tpu.pipeline_mode<synchronous>, transform_indices = @transform_2, window_bounds = array<i64: 1, 8>}, {pipeline_mode = #tpu.pipeline_mode<synchronous>, transform_indices = @transform_3, window_bounds = array<i64: 1, 8>}, {pipeline_mode = #tpu.pipeline_mode<synchronous>, transform_indices = @transform_4, window_bounds = array<i64: 32, 128>}]} {
    %c0 = arith.constant 0 : index
    %c0_0 = arith.constant 0 : index
    %c0_1 = arith.constant 0 : index
    %0 = vector.load %arg1[%c0, %c0_0, %c0_1] : memref<2x18x72xbf16, #tpu.memory_space<vmem>>, vector<2x18x72xbf16>
    %cst = arith.constant 0.000000e+00 : f32
    %1 = vector.broadcast %cst : f32 to vector<32x128xf32>
    %2 = vector.extract_strided_slice %0 {offsets = [0, 0, 0], sizes = [2, 16, 72], strides = [1, 1, 1]} : vector<2x18x72xbf16> to vector<2x16x72xbf16>
    %3 = vector.shape_cast %2 : vector<2x16x72xbf16> to vector<32x72xbf16>
    %c0_2 = arith.constant 0 : index
    %c0_3 = arith.constant 0 : index
    %c0_4 = arith.constant 0 : index
    %4 = vector.load %arg2[%c0_2, %c0_3, %c0_4] : memref<3x72x128xbf16, #tpu.memory_space<vmem>>, vector<1x72x128xbf16>
    %5 = vector.shape_cast %4 : vector<1x72x128xbf16> to vector<72x128xbf16>
    %cst_5 = arith.constant dense<0.000000e+00> : vector<32x128xf32>
    %6 = tpu.matmul %3, %5, %cst_5 {dimension_numbers = #tpu.dot_dimension_numbers<[1], [0], [0], [1], [0, 0, 1, 1], [], []>} : vector<32x72xbf16>, vector<72x128xbf16>, vector<32x128xf32> -> vector<32x128xf32>
    %7 = arith.addf %1, %6 : vector<32x128xf32>
    %8 = vector.extract_strided_slice %0 {offsets = [0, 1, 0], sizes = [2, 16, 72], strides = [1, 1, 1]} : vector<2x18x72xbf16> to vector<2x16x72xbf16>
    %9 = vector.shape_cast %8 : vector<2x16x72xbf16> to vector<32x72xbf16>
    %c1 = arith.constant 1 : index
    %c0_6 = arith.constant 0 : index
    %c0_7 = arith.constant 0 : index
    %10 = vector.load %arg2[%c1, %c0_6, %c0_7] : memref<3x72x128xbf16, #tpu.memory_space<vmem>>, vector<1x72x128xbf16>
    %11 = vector.shape_cast %10 : vector<1x72x128xbf16> to vector<72x128xbf16>
    %cst_8 = arith.constant dense<0.000000e+00> : vector<32x128xf32>
    %12 = tpu.matmul %9, %11, %cst_8 {dimension_numbers = #tpu.dot_dimension_numbers<[1], [0], [0], [1], [0, 0, 1, 1], [], []>} : vector<32x72xbf16>, vector<72x128xbf16>, vector<32x128xf32> -> vector<32x128xf32>
    %13 = arith.addf %7, %12 : vector<32x128xf32>
    %14 = vector.extract_strided_slice %0 {offsets = [0, 2, 0], sizes = [2, 16, 72], strides = [1, 1, 1]} : vector<2x18x72xbf16> to vector<2x16x72xbf16>
    %15 = vector.shape_cast %14 : vector<2x16x72xbf16> to vector<32x72xbf16>
    %c2 = arith.constant 2 : index
    %c0_9 = arith.constant 0 : index
    %c0_10 = arith.constant 0 : index
    %16 = vector.load %arg2[%c2, %c0_9, %c0_10] : memref<3x72x128xbf16, #tpu.memory_space<vmem>>, vector<1x72x128xbf16>
    %17 = vector.shape_cast %16 : vector<1x72x128xbf16> to vector<72x128xbf16>
    %cst_11 = arith.constant dense<0.000000e+00> : vector<32x128xf32>
    %18 = tpu.matmul %15, %17, %cst_11 {dimension_numbers = #tpu.dot_dimension_numbers<[1], [0], [0], [1], [0, 0, 1, 1], [], []>} : vector<32x72xbf16>, vector<72x128xbf16>, vector<32x128xf32> -> vector<32x128xf32>
    %19 = arith.addf %13, %18 : vector<32x128xf32>
    %cst_12 = arith.constant 0.000000e+00 : f32
    %20 = vector.broadcast %cst_12 : f32 to vector<32x128xf32>
    %21 = arith.maximumf %19, %20 : vector<32x128xf32>
    %22 = tpu.iota {dimensions = array<i32: 0>} : vector<128x8xi32>
    %23 = tpu.iota {dimensions = array<i32: 1>} : vector<128x8xi32>
    %c8_i32 = arith.constant 8 : i32
    %c0_i32 = arith.constant 0 : i32
    %24 = arith.cmpi eq, %c8_i32, %c0_i32 : i32
    %c1_i32 = arith.constant 1 : i32
    %25 = arith.select %24, %c1_i32, %c8_i32 : i32
    %26 = vector.broadcast %25 : i32 to vector<128x8xi32>
    %27 = arith.remsi %22, %26 : vector<128x8xi32>
    %c0_i32_13 = arith.constant 0 : i32
    %28 = vector.broadcast %c0_i32_13 : i32 to vector<128x8xi32>
    %29 = arith.cmpi ne, %27, %28 : vector<128x8xi32>
    %c0_i32_14 = arith.constant 0 : i32
    %30 = vector.broadcast %c0_i32_14 : i32 to vector<128x8xi32>
    %31 = arith.cmpi slt, %27, %30 : vector<128x8xi32>
    %c0_i32_15 = arith.constant 0 : i32
    %32 = arith.cmpi slt, %25, %c0_i32_15 : i32
    %33 = vector.broadcast %32 : i1 to vector<128x8xi1>
    %34 = vector.broadcast %33 : vector<128x8xi1> to vector<128x8xi1>
    %35 = arith.xori %31, %34 : vector<128x8xi1>
    %36 = arith.andi %35, %29 : vector<128x8xi1>
    %37 = vector.broadcast %25 : i32 to vector<128x8xi32>
    %38 = arith.addi %27, %37 : vector<128x8xi32>
    %39 = arith.select %36, %38, %27 : vector<128x8xi1>, vector<128x8xi32>
    %40 = arith.cmpi eq, %39, %23 : vector<128x8xi32>
    %41 = arith.extui %40 : vector<128x8xi1> to vector<128x8xi32>
    %42 = arith.sitofp %41 : vector<128x8xi32> to vector<128x8xf32>
    %43 = tpu.iota {dimensions = array<i32: 0>} : vector<8x128xi32>
    %44 = tpu.iota {dimensions = array<i32: 1>} : vector<8x128xi32>
    %c8_i32_16 = arith.constant 8 : i32
    %c0_i32_17 = arith.constant 0 : i32
    %45 = arith.cmpi eq, %c8_i32_16, %c0_i32_17 : i32
    %c1_i32_18 = arith.constant 1 : i32
    %46 = arith.select %45, %c1_i32_18, %c8_i32_16 : i32
    %47 = vector.broadcast %46 : i32 to vector<8x128xi32>
    %48 = arith.remsi %44, %47 : vector<8x128xi32>
    %c0_i32_19 = arith.constant 0 : i32
    %49 = vector.broadcast %c0_i32_19 : i32 to vector<8x128xi32>
    %50 = arith.cmpi ne, %48, %49 : vector<8x128xi32>
    %c0_i32_20 = arith.constant 0 : i32
    %51 = vector.broadcast %c0_i32_20 : i32 to vector<8x128xi32>
    %52 = arith.cmpi slt, %48, %51 : vector<8x128xi32>
    %c0_i32_21 = arith.constant 0 : i32
    %53 = arith.cmpi slt, %46, %c0_i32_21 : i32
    %54 = vector.broadcast %53 : i1 to vector<8x128xi1>
    %55 = vector.broadcast %54 : vector<8x128xi1> to vector<8x128xi1>
    %56 = arith.xori %52, %55 : vector<8x128xi1>
    %57 = arith.andi %56, %50 : vector<8x128xi1>
    %58 = vector.broadcast %46 : i32 to vector<8x128xi32>
    %59 = arith.addi %48, %58 : vector<8x128xi32>
    %60 = arith.select %57, %59, %48 : vector<8x128xi1>, vector<8x128xi32>
    %61 = arith.cmpi eq, %60, %43 : vector<8x128xi32>
    %62 = arith.extui %61 : vector<8x128xi1> to vector<8x128xi32>
    %63 = arith.sitofp %62 : vector<8x128xi32> to vector<8x128xf32>
    %cst_22 = arith.constant dense<0.000000e+00> : vector<128xf32>
    %64 = vector.multi_reduction <add>, %21, %cst_22 [0] : vector<32x128xf32> to vector<128xf32>
    %65 = vector.shape_cast %64 : vector<128xf32> to vector<1x128xf32>
    %66 = arith.mulf %21, %21 : vector<32x128xf32>
    %cst_23 = arith.constant dense<0.000000e+00> : vector<128xf32>
    %67 = vector.multi_reduction <add>, %66, %cst_23 [0] : vector<32x128xf32> to vector<128xf32>
    %68 = vector.shape_cast %67 : vector<128xf32> to vector<1x128xf32>
    %cst_24 = arith.constant dense<0.000000e+00> : vector<1x8xf32>
    %69 = tpu.matmul %65, %42, %cst_24 {dimension_numbers = #tpu.dot_dimension_numbers<[1], [0], [0], [1], [0, 0, 1, 1], [], []>} : vector<1x128xf32>, vector<128x8xf32>, vector<1x8xf32> -> vector<1x8xf32>
    %cst_25 = arith.constant 0.001953125 : f32
    %70 = vector.broadcast %cst_25 : f32 to vector<1x8xf32>
    %71 = arith.mulf %69, %70 : vector<1x8xf32>
    %cst_26 = arith.constant dense<0.000000e+00> : vector<1x8xf32>
    %72 = tpu.matmul %68, %42, %cst_26 {dimension_numbers = #tpu.dot_dimension_numbers<[1], [0], [0], [1], [0, 0, 1, 1], [], []>} : vector<1x128xf32>, vector<128x8xf32>, vector<1x8xf32> -> vector<1x8xf32>
    %cst_27 = arith.constant 0.001953125 : f32
    %73 = vector.broadcast %cst_27 : f32 to vector<1x8xf32>
    %74 = arith.mulf %72, %73 : vector<1x8xf32>
    %75 = arith.mulf %71, %71 : vector<1x8xf32>
    %76 = arith.subf %74, %75 : vector<1x8xf32>
    %cst_28 = arith.constant 0.000000e+00 : f32
    %77 = vector.broadcast %cst_28 : f32 to vector<1x8xf32>
    %78 = arith.maximumf %76, %77 : vector<1x8xf32>
    %cst_29 = arith.constant 9.99999974E-6 : f32
    %79 = vector.broadcast %cst_29 : f32 to vector<1x8xf32>
    %80 = arith.addf %78, %79 : vector<1x8xf32>
    %81 = math.rsqrt %80 : vector<1x8xf32>
    %c0_30 = arith.constant 0 : index
    %c0_31 = arith.constant 0 : index
    %82 = vector.load %arg3[%c0_30, %c0_31] : memref<1x8xf32, #tpu.memory_space<vmem>>, vector<1x8xf32>
    %83 = arith.mulf %82, %81 : vector<1x8xf32>
    %c0_32 = arith.constant 0 : index
    %c0_33 = arith.constant 0 : index
    %84 = vector.load %arg4[%c0_32, %c0_33] : memref<1x8xf32, #tpu.memory_space<vmem>>, vector<1x8xf32>
    %85 = arith.mulf %71, %83 : vector<1x8xf32>
    %86 = arith.subf %84, %85 : vector<1x8xf32>
    %cst_34 = arith.constant dense<0.000000e+00> : vector<1x128xf32>
    %87 = tpu.matmul %83, %63, %cst_34 {dimension_numbers = #tpu.dot_dimension_numbers<[1], [0], [0], [1], [0, 0, 1, 1], [], []>} : vector<1x8xf32>, vector<8x128xf32>, vector<1x128xf32> -> vector<1x128xf32>
    %cst_35 = arith.constant dense<0.000000e+00> : vector<1x128xf32>
    %88 = tpu.matmul %86, %63, %cst_35 {dimension_numbers = #tpu.dot_dimension_numbers<[1], [0], [0], [1], [0, 0, 1, 1], [], []>} : vector<1x8xf32>, vector<8x128xf32>, vector<1x128xf32> -> vector<1x128xf32>
    %89 = vector.broadcast %87 : vector<1x128xf32> to vector<32x128xf32>
    %90 = arith.mulf %21, %89 : vector<32x128xf32>
    %91 = vector.broadcast %88 : vector<1x128xf32> to vector<32x128xf32>
    %92 = arith.addf %90, %91 : vector<32x128xf32>
    %c0_36 = arith.constant 0 : index
    %c0_37 = arith.constant 0 : index
    %93 = vector.load %arg5[%c0_36, %c0_37] : memref<32x128xf32, #tpu.memory_space<vmem>>, vector<32x128xf32>
    tpu.vector_store %arg5[%c0_36, %c0_37], %92 {strides = array<i32>} : memref<32x128xf32, #tpu.memory_space<vmem>>, vector<32x128xf32>,
    return
  }
  func.func @transform_0(%arg0: i32) -> (i32, i32, i32) {
    %c0_i32 = arith.constant 0 : i32
    %c0_i32_0 = arith.constant 0 : i32
    %c0_i32_1 = arith.constant 0 : i32
    %c0_i32_2 = arith.constant 0 : i32
    return %c0_i32, %c0_i32_0, %c0_i32_1 : i32, i32, i32
  }
  func.func @transform_1(%arg0: i32) -> (i32, i32, i32) {
    %c0_i32 = arith.constant 0 : i32
    %c0_i32_0 = arith.constant 0 : i32
    %c0_i32_1 = arith.constant 0 : i32
    %c0_i32_2 = arith.constant 0 : i32
    return %c0_i32, %c0_i32_0, %c0_i32_1 : i32, i32, i32
  }
  func.func @transform_2(%arg0: i32) -> (i32, i32) {
    %c0_i32 = arith.constant 0 : i32
    %c0_i32_0 = arith.constant 0 : i32
    %c0_i32_1 = arith.constant 0 : i32
    return %c0_i32, %c0_i32_0 : i32, i32
  }
  func.func @transform_3(%arg0: i32) -> (i32, i32) {
    %c0_i32 = arith.constant 0 : i32
    %c0_i32_0 = arith.constant 0 : i32
    %c0_i32_1 = arith.constant 0 : i32
    return %c0_i32, %c0_i32_0 : i32, i32
  }
  func.func @transform_4(%arg0: i32) -> (i32, i32) {
    %c0_i32 = arith.constant 0 : i32
    %c0_i32_0 = arith.constant 0 : i32
    %c0_i32_1 = arith.constant 0 : i32
    return %c0_i32, %c0_i32_0 : i32, i32
  }
}

</mosaic_0001>

<llo_original>
// kernel: tpu_custom_call.1
$region0: #{tpu_custom_call.1}
  #allocation0 [shape = 'u32[]', space=smem, size = 0x4, offset = 0x4, fixed_abs, tag = 'smem constant byte address 0x4 - core index']
  #allocation1 [shape = 'u32[72,128]{1,0:T(1,128)}', space=vmem, size = 0x9000, scoped, tag = 'internal scratch']
  %s0 = inlined_call_operand.vmem [shape: bf16[2,18,72], index: 0, kind: input, shape index: {}]
  %s1 = inlined_call_operand.hbm [shape: bf16[3,72,128], index: 1, kind: input, shape index: {}]
  %s2 = inlined_call_operand.vmem [shape: f32[1,8], index: 2, kind: input, shape index: {}]
  %s3 = inlined_call_operand.vmem [shape: f32[1,8], index: 3, kind: input, shape index: {}]
  %s4 = inlined_call_operand.hbm [shape: f32[32,128], index: 4, kind: output, shape index: {}]
  %s5 = sld [smem:[#allocation0]]
  $region30: #{tpu_custom_call.1} parent=0
    _
  %s7 = ssub.s32 1, %s5
  %s8 = scalar_select 0, %s7, %s5
  $region1: #{tpu_custom_call.1} parent=0
    #allocation2 [shape = 'u8[55296]{0}', space=vmem, size = 0xd800, scoped, tag = 'input window, operand 1, single buffered']
    #allocation3 [shape = 's32[1]{0}', space=sflag, size = 0x4, scoped, tag = 'scoped memory for tpu_custom_call.1']
    #allocation4 [shape = 's32[1]{0}', space=sflag, size = 0x4, scoped, tag = 'scoped memory for tpu_custom_call.1']
    #allocation5 [shape = 'u8[16384]{0}', space=vmem, size = 0x4000, scoped, tag = 'output window, operand 0, single buffered']
    %9 = vsyncpa [#allocation3], 0
    %10 = vsyncpa [#allocation4], 0
    // Predicated region
    $region2: #{tpu_custom_call.1} parent=1 // pred_check
      _
    $region3: #{tpu_custom_call.1} parent=1 // pred_check_branch
      %12 = sbr.rel (0) target = $region5
    $region4: #{tpu_custom_call.1} parent=1 // pred_region
      _
    $region5: #{tpu_custom_call.1} parent=1 // pred_fallthru
      _
    // Predicated region
    $region6: #{tpu_custom_call.1} parent=1 // pred_check
      _
    $region7: #{tpu_custom_call.1} parent=1 // pred_check_branch
      %14 = sbr.rel (0) target = $region9
    $region8: #{tpu_custom_call.1} parent=1 // pred_region
      %16 = vsyncadd [#allocation3], 0
      %s17 = sshll.u32 %s1, 4
      %s18 = int_to_ptr.hbm [resolvable:$true] %s17
      %s19 = sshll.u32 [#allocation2], 4
      %s20 = int_to_ptr.vmem [resolvable:$true] %s19
      %25 = dma.hbm_to_vmem [thread:$0]  %s18, 1728, %s20, [#allocation3], 64, 64, 4
    $region9: #{tpu_custom_call.1} parent=1 // pred_fallthru
      _
    // Predicated region
    $region10: #{tpu_custom_call.1} parent=1 // pred_check
      _
    $region11: #{tpu_custom_call.1} parent=1 // pred_check_branch
      %27 = sbr.rel (0) target = $region13
    $region12: #{tpu_custom_call.1} parent=1 // pred_region
      _
    $region13: #{tpu_custom_call.1} parent=1 // pred_fallthru
      _
    // Predicated region
    $region14: #{tpu_custom_call.1} parent=1 // pred_check
      _
    $region15: #{tpu_custom_call.1} parent=1 // pred_check_branch
      %29 = sbr.rel (0) target = $region17
    $region16: #{tpu_custom_call.1} parent=1 // pred_region
      _
    $region17: #{tpu_custom_call.1} parent=1 // pred_fallthru
      _
    // Predicated region
    $region18: #{tpu_custom_call.1} parent=1 // pred_check
      _
    $region19: #{tpu_custom_call.1} parent=1 // pred_check_branch
      %31 = sbr.rel (0) target = $region21
    $region20: #{tpu_custom_call.1} parent=1 // pred_region
      %33 = dma.done [#allocation3], 1728
    $region21: #{tpu_custom_call.1} parent=1 // pred_fallthru
      _
    %v35 = vld [vmem:[%s0] sm:$0xf]
    %v36 = vld [vmem:[%s0 + $0x4] sm:$0xf]
    %v37 = vld [vmem:[%s0 + $0x8] sm:$0x1]
    %v38 = vld [vmem:[%s0 + $0xc] sm:$0xf]
    %v39 = vld [vmem:[%s0 + $0x10] sm:$0xf]
    %v40 = vld [vmem:[%s0 + $0x14] sm:$0x1]
    %v41 = vld [vmem:[#allocation2] sm:$0xf]
    %v42 = vld [vmem:[#allocation2 + $0x4] sm:$0xf]
    %v43 = vld [vmem:[#allocation2 + $0x8] sm:$0xf]
    %v44 = vld [vmem:[#allocation2 + $0xc] sm:$0xf]
    %v45 = vld [vmem:[#allocation2 + $0x10] sm:$0xf]
    %v46 = vld [vmem:[#allocation2 + $0x14] sm:$0xf]
    %v47 = vld [vmem:[#allocation2 + $0x18] sm:$0xf]
    %v48 = vld [vmem:[#allocation2 + $0x1c] sm:$0xf]
    %v49 = vld [vmem:[#allocation2 + $0x20] sm:$0xf]
    %vm50 = vsmask.f32 3328
    %vm51 = vsmask.f32 7440
    %vm52 = vmor %vm50, %vm51
    %v54 = vshrl.u32 %v35, 16
    %v56 = vrot.slane %v54, 4
    %v57 = vshll.u32 %v35, 16
    %v59 = vrot.slane %v57, 5
    %v60 = vor.u32 %v56, %v59
    %v61 = vrot.slane %v60, 4
    %v63 = vshll.u32 %v36, 16
    %v65 = vrot.slane %v63, 5
    %v66 = vsel %vm52, %v61, %v65
    %v67 = vshrl.u32 %v36, 16
    %v69 = vrot.slane %v67, 4
    %v70 = vor.u32 %v69, %v65
    %v71 = vrot.slane %v70, 4
    %v73 = vshll.u32 %v37, 16
    %v75 = vrot.slane %v73, 5
    %v76 = vsel %vm52, %v71, %v75
    %v78 = vshrl.u32 %v38, 16
    %v80 = vrot.slane %v78, 4
    %v81 = vshll.u32 %v38, 16
    %v83 = vrot.slane %v81, 5
    %v84 = vor.u32 %v80, %v83
    %v85 = vrot.slane %v84, 4
    %v87 = vshll.u32 %v39, 16
    %v89 = vrot.slane %v87, 5
    %v90 = vsel %vm52, %v85, %v89
    %v91 = vshrl.u32 %v39, 16
    %v93 = vrot.slane %v91, 4
    %v94 = vor.u32 %v93, %v89
    %v95 = vrot.slane %v94, 4
    %v97 = vshll.u32 %v40, 16
    %v99 = vrot.slane %v97, 5
    %v100 = vsel %vm52, %v95, %v99
    %s101 = scalar_lea.vmem [#allocation2], 36
    %v102 = vld [vmem:[%s101] sm:$0xf]
    %v103 = vld [vmem:[%s101 + $0x4] sm:$0xf]
    %v104 = vld [vmem:[%s101 + $0x8] sm:$0xf]
    %v105 = vld [vmem:[%s101 + $0xc] sm:$0xf]
    %v106 = vld [vmem:[%s101 + $0x10] sm:$0xf]
    %v107 = vld [vmem:[%s101 + $0x14] sm:$0xf]
    %v108 = vld [vmem:[%s101 + $0x18] sm:$0xf]
    %v109 = vld [vmem:[%s101 + $0x1c] sm:$0xf]
    %v110 = vld [vmem:[%s101 + $0x20] sm:$0xf]
    %v111 = vunpack.c.l.b16 %v66
    %v112 = vunpack.c.l.b16 %v76
    %v113 = vunpack.c.l.b16 %v90
    %v114 = vunpack.c.l.b16 %v100
    %v115 = vpack.c.b16 %v112, %v111
    %v116 = vpack.c.b16 %v114, %v113
    %v126 = vunpack.c.l.b16 %v102
    %v127 = vunpack.c.l.b16 %v103
    %v128 = vunpack.c.l.b16 %v104
    %v129 = vunpack.c.l.b16 %v105
    %v130 = vunpack.c.l.b16 %v106
    %v131 = vunpack.c.l.b16 %v107
    %v132 = vunpack.c.l.b16 %v108
    %v133 = vunpack.c.l.b16 %v109
    %v134 = vunpack.c.l.b16 %v110
    %v135 = vpack.c.b16 %v127, %v126
    %v136 = vpack.c.b16 %v129, %v128
    %v137 = vpack.c.b16 %v131, %v130
    %v138 = vpack.c.b16 %v133, %v132
    %v139 = vpack.c.b16 %v134, %v134
    %vm144 = vcmask 588800
    %v146 = vsel %vm144, %v115, 0
    %v149 = vsel %vm144, %v116, 0
    %vm151 = vcmask 1043456
    %v153 = vsel %vm151, %v139, 0
    %155 = vmatpush.bf16.msra.mxu0 0
    %156 = vmatpush.bf16.msra.mxu0 0
    %157 = vmatpush.bf16.msra.mxu0 0
    %158 = vmatpush.bf16.msra.mxu0 %v153
    %159 = vmatpush.bf16.msra.mxu0 %v138
    %160 = vmatpush.bf16.msra.mxu0 %v137
    %161 = vmatpush.bf16.msra.mxu0 %v136
    %162 = vmatpush.bf16.msra.mxu0 %v135
    %163 = vmatmul.bf16.gmra.mxu0 %v146
    %v164 = vpop.f32.mrf.mxu0
    %v165 = vadd.f32 0.0, %v164
    %v166 = vpop.f32.mrf.mxu0
    %v167 = vadd.f32 0.0, %v166
    %168 = vmatmul.bf16.gmra.mxu0 %v149
    %v169 = vpop.f32.mrf.mxu0
    %v170 = vadd.f32 0.0, %v169
    %v171 = vpop.f32.mrf.mxu0
    %v172 = vadd.f32 0.0, %v171
    %173 = vdwg.mxu0
    %v178 = vunpack.c.l.b16 %v35
    %v179 = vunpack.c.l.b16 %v36
    %v180 = vunpack.c.l.b16 %v38
    %v181 = vunpack.c.l.b16 %v39
    %v182 = vpack.c.b16 %v179, %v178
    %v183 = vpack.c.b16 %v181, %v180
    %v193 = vunpack.c.l.b16 %v41
    %v194 = vunpack.c.l.b16 %v42
    %v195 = vunpack.c.l.b16 %v43
    %v196 = vunpack.c.l.b16 %v44
    %v197 = vunpack.c.l.b16 %v45
    %v198 = vunpack.c.l.b16 %v46
    %v199 = vunpack.c.l.b16 %v47
    %v200 = vunpack.c.l.b16 %v48
    %v201 = vunpack.c.l.b16 %v49
    %v202 = vpack.c.b16 %v194, %v193
    %v203 = vpack.c.b16 %v196, %v195
    %v204 = vpack.c.b16 %v198, %v197
    %v205 = vpack.c.b16 %v200, %v199
    %v206 = vpack.c.b16 %v201, %v201
    %v212 = vsel %vm144, %v182, 0
    %v215 = vsel %vm144, %v183, 0
    %v218 = vsel %vm151, %v206, 0
    %220 = vmatpush.bf16.msra.mxu0 0
    %221 = vmatpush.bf16.msra.mxu0 0
    %222 = vmatpush.bf16.msra.mxu0 0
    %223 = vmatpush.bf16.msra.mxu0 %v218
    %224 = vmatpush.bf16.msra.mxu0 %v205
    %225 = vmatpush.bf16.msra.mxu0 %v204
    %226 = vmatpush.bf16.msra.mxu0 %v203
    %227 = vmatpush.bf16.msra.mxu0 %v202
    %228 = vmatmul.bf16.gmra.mxu0 %v212
    %v229 = vpop.f32.mrf.mxu0
    %v230 = vadd.f32 %v165, %v229
    %v231 = vpop.f32.mrf.mxu0
    %v232 = vadd.f32 %v167, %v231
    %233 = vmatmul.bf16.gmra.mxu0 %v215
    %v234 = vpop.f32.mrf.mxu0
    %v235 = vadd.f32 %v170, %v234
    %v236 = vpop.f32.mrf.mxu0
    %v237 = vadd.f32 %v172, %v236
    %238 = vdwg.mxu0
    %vm241 = vcmask 1042432
    %vm242 = vcmask 1046532
    %vm243 = vmor %vm241, %vm242
    %v244 = vrot.slane %v35, 5
    %v245 = vrot.slane %v244, 4
    %v246 = vrot.slane %v36, 5
    %v247 = vsel %vm243, %v245, %v246
    %v248 = vrot.slane %v246, 4
    %v249 = vrot.slane %v37, 5
    %v250 = vsel %vm243, %v248, %v249
    %v251 = vrot.slane %v38, 5
    %v252 = vrot.slane %v251, 4
    %v253 = vrot.slane %v39, 5
    %v254 = vsel %vm243, %v252, %v253
    %v255 = vrot.slane %v253, 4
    %v256 = vrot.slane %v40, 5
    %v257 = vsel %vm243, %v255, %v256
    %s258 = scalar_lea.vmem [#allocation2], 72
    %v259 = vld [vmem:[%s258] sm:$0xf]
    %v260 = vld [vmem:[%s258 + $0x4] sm:$0xf]
    %v261 = vld [vmem:[%s258 + $0x8] sm:$0xf]
    %v262 = vld [vmem:[%s258 + $0xc] sm:$0xf]
    %v263 = vld [vmem:[%s258 + $0x10] sm:$0xf]
    %v264 = vld [vmem:[%s258 + $0x14] sm:$0xf]
    %v265 = vld [vmem:[%s258 + $0x18] sm:$0xf]
    %v266 = vld [vmem:[%s258 + $0x1c] sm:$0xf]
    %v267 = vld [vmem:[%s258 + $0x20] sm:$0xf]
    %v268 = vunpack.c.l.b16 %v247
    %v269 = vunpack.c.l.b16 %v250
    %v270 = vunpack.c.l.b16 %v254
    %v271 = vunpack.c.l.b16 %v257
    %v272 = vpack.c.b16 %v269, %v268
    %v273 = vpack.c.b16 %v271, %v270
    %v283 = vunpack.c.l.b16 %v259
    %v284 = vunpack.c.l.b16 %v260
    %v285 = vunpack.c.l.b16 %v261
    %v286 = vunpack.c.l.b16 %v262
    %v287 = vunpack.c.l.b16 %v263
    %v288 = vunpack.c.l.b16 %v264
    %v289 = vunpack.c.l.b16 %v265
    %v290 = vunpack.c.l.b16 %v266
    %v291 = vunpack.c.l.b16 %v267
    %v292 = vpack.c.b16 %v284, %v283
    %v293 = vpack.c.b16 %v286, %v285
    %v294 = vpack.c.b16 %v288, %v287
    %v295 = vpack.c.b16 %v290, %v289
    %v296 = vpack.c.b16 %v291, %v291
    %v302 = vsel %vm144, %v272, 0
    %v305 = vsel %vm144, %v273, 0
    %v308 = vsel %vm151, %v296, 0
    %310 = vmatpush.bf16.msra.mxu0 0
    %311 = vmatpush.bf16.msra.mxu0 0
    %312 = vmatpush.bf16.msra.mxu0 0
    %313 = vmatpush.bf16.msra.mxu0 %v308
    %314 = vmatpush.bf16.msra.mxu0 %v295
    %315 = vmatpush.bf16.msra.mxu0 %v294
    %316 = vmatpush.bf16.msra.mxu0 %v293
    %317 = vmatpush.bf16.msra.mxu0 %v292
    %318 = vmatmul.bf16.gmra.mxu0 %v302
    %v319 = vpop.f32.mrf.mxu0
    %v320 = vadd.f32 0.0, %v319
    %v321 = vpop.f32.mrf.mxu0
    %v322 = vadd.f32 0.0, %v321
    %323 = vmatmul.bf16.gmra.mxu0 %v305
    %v324 = vpop.f32.mrf.mxu0
    %v325 = vadd.f32 0.0, %v324
    %v326 = vpop.f32.mrf.mxu0
    %v327 = vadd.f32 0.0, %v326
    %328 = vdwg.mxu0
    %v329 = vadd.f32 %v230, %v320
    %v330 = vadd.f32 %v232, %v322
    %v331 = vadd.f32 %v235, %v325
    %v332 = vadd.f32 %v237, %v327
    %v333 = vmax.f32 %v329, 0.0
    %v334 = vmax.f32 %v330, 0.0
    %v335 = vmax.f32 %v331, 0.0
    %v336 = vmax.f32 %v332, 0.0
    %v337 = vlaneseq
    %v338 = vshrl.u32 %v337, 7
    %v339 = vadd.s32 %v338, 8
    %v340 = vadd.s32 %v338, 16
    %v341 = vadd.s32 %v338, 24
    %v342 = vadd.s32 %v338, 32
    %v343 = vadd.s32 %v338, 40
    %v344 = vadd.s32 %v338, 48
    %v345 = vadd.s32 %v338, 56
    %v346 = vadd.s32 %v338, 64
    %v347 = vadd.s32 %v338, 72
    %v348 = vadd.s32 %v338, 80
    %v349 = vadd.s32 %v338, 88
    %v350 = vadd.s32 %v338, 96
    %v351 = vadd.s32 %v338, 104
    %v352 = vadd.s32 %v338, 112
    %v353 = vadd.s32 %v338, 120
    %v354 = vlaneseq
    %v355 = vand.u32 %v354, 127
    %vm356 = vcmp.lt.s32.totalorder %v338, 0
    %v357 = vsub.s32 0, %v338
    %v358 = vsel %vm356, %v357, %v338
    %v359 = vshrl.u32 %v358, 3
    %v360 = vand.u32 %v358, 7
    %v361 = vsub.s32 0, %v360
    %v362 = vsel %vm356, %v361, %v360
    %vm363 = vcmp.lt.s32.totalorder %v339, 0
    %v364 = vsub.s32 0, %v339
    %v365 = vsel %vm363, %v364, %v339
    %v366 = vshrl.u32 %v365, 3
    %v367 = vand.u32 %v365, 7
    %v368 = vsub.s32 0, %v367
    %v369 = vsel %vm363, %v368, %v367
    %vm370 = vcmp.lt.s32.totalorder %v340, 0
    %v371 = vsub.s32 0, %v340
    %v372 = vsel %vm370, %v371, %v340
    %v373 = vshrl.u32 %v372, 3
    %v374 = vand.u32 %v372, 7
    %v375 = vsub.s32 0, %v374
    %v376 = vsel %vm370, %v375, %v374
    %vm377 = vcmp.lt.s32.totalorder %v341, 0
    %v378 = vsub.s32 0, %v341
    %v379 = vsel %vm377, %v378, %v341
    %v380 = vshrl.u32 %v379, 3
    %v381 = vand.u32 %v379, 7
    %v382 = vsub.s32 0, %v381
    %v383 = vsel %vm377, %v382, %v381
    %vm384 = vcmp.lt.s32.totalorder %v342, 0
    %v385 = vsub.s32 0, %v342
    %v386 = vsel %vm384, %v385, %v342
    %v387 = vshrl.u32 %v386, 3
    %v388 = vand.u32 %v386, 7
    %v389 = vsub.s32 0, %v388
    %v390 = vsel %vm384, %v389, %v388
    %vm391 = vcmp.lt.s32.totalorder %v343, 0
    %v392 = vsub.s32 0, %v343
    %v393 = vsel %vm391, %v392, %v343
    %v394 = vshrl.u32 %v393, 3
    %v395 = vand.u32 %v393, 7
    %v396 = vsub.s32 0, %v395
    %v397 = vsel %vm391, %v396, %v395
    %vm398 = vcmp.lt.s32.totalorder %v344, 0
    %v399 = vsub.s32 0, %v344
    %v400 = vsel %vm398, %v399, %v344
    %v401 = vshrl.u32 %v400, 3
    %v402 = vand.u32 %v400, 7
    %v403 = vsub.s32 0, %v402
    %v404 = vsel %vm398, %v403, %v402
    %vm405 = vcmp.lt.s32.totalorder %v345, 0
    %v406 = vsub.s32 0, %v345
    %v407 = vsel %vm405, %v406, %v345
    %v408 = vshrl.u32 %v407, 3
    %v409 = vand.u32 %v407, 7
    %v410 = vsub.s32 0, %v409
    %v411 = vsel %vm405, %v410, %v409
    %vm412 = vcmp.lt.s32.totalorder %v346, 0
    %v413 = vsub.s32 0, %v346
    %v414 = vsel %vm412, %v413, %v346
    %v415 = vshrl.u32 %v414, 3
    %v416 = vand.u32 %v414, 7
    %v417 = vsub.s32 0, %v416
    %v418 = vsel %vm412, %v417, %v416
    %vm419 = vcmp.lt.s32.totalorder %v347, 0
    %v420 = vsub.s32 0, %v347
    %v421 = vsel %vm419, %v420, %v347
    %v422 = vshrl.u32 %v421, 3
    %v423 = vand.u32 %v421, 7
    %v424 = vsub.s32 0, %v423
    %v425 = vsel %vm419, %v424, %v423
    %vm426 = vcmp.lt.s32.totalorder %v348, 0
    %v427 = vsub.s32 0, %v348
    %v428 = vsel %vm426, %v427, %v348
    %v429 = vshrl.u32 %v428, 3
    %v430 = vand.u32 %v428, 7
    %v431 = vsub.s32 0, %v430
    %v432 = vsel %vm426, %v431, %v430
    %vm433 = vcmp.lt.s32.totalorder %v349, 0
    %v434 = vsub.s32 0, %v349
    %v435 = vsel %vm433, %v434, %v349
    %v436 = vshrl.u32 %v435, 3
    %v437 = vand.u32 %v435, 7
    %v438 = vsub.s32 0, %v437
    %v439 = vsel %vm433, %v438, %v437
    %vm440 = vcmp.lt.s32.totalorder %v350, 0
    %v441 = vsub.s32 0, %v350
    %v442 = vsel %vm440, %v441, %v350
    %v443 = vshrl.u32 %v442, 3
    %v444 = vand.u32 %v442, 7
    %v445 = vsub.s32 0, %v444
    %v446 = vsel %vm440, %v445, %v444
    %vm447 = vcmp.lt.s32.totalorder %v351, 0
    %v448 = vsub.s32 0, %v351
    %v449 = vsel %vm447, %v448, %v351
    %v450 = vshrl.u32 %v449, 3
    %v451 = vand.u32 %v449, 7
    %v452 = vsub.s32 0, %v451
    %v453 = vsel %vm447, %v452, %v451
    %vm454 = vcmp.lt.s32.totalorder %v352, 0
    %v455 = vsub.s32 0, %v352
    %v456 = vsel %vm454, %v455, %v352
    %v457 = vshrl.u32 %v456, 3
    %v458 = vand.u32 %v456, 7
    %v459 = vsub.s32 0, %v458
    %v460 = vsel %vm454, %v459, %v458
    %vm461 = vcmp.lt.s32.totalorder %v353, 0
    %v462 = vsub.s32 0, %v353
    %v463 = vsel %vm461, %v462, %v353
    %v464 = vshrl.u32 %v463, 3
    %v465 = vand.u32 %v463, 7
    %v466 = vsub.s32 0, %v465
    %v467 = vsel %vm461, %v466, %v465
    %vm468 = vcmp.ne.s32.totalorder %v362, 0
    %vm469 = vcmp.ne.s32.totalorder %v369, 0
    %vm470 = vcmp.ne.s32.totalorder %v376, 0
    %vm471 = vcmp.ne.s32.totalorder %v383, 0
    %vm472 = vcmp.ne.s32.totalorder %v390, 0
    %vm473 = vcmp.ne.s32.totalorder %v397, 0
    %vm474 = vcmp.ne.s32.totalorder %v404, 0
    %vm475 = vcmp.ne.s32.totalorder %v411, 0
    %vm476 = vcmp.ne.s32.totalorder %v418, 0
    %vm477 = vcmp.ne.s32.totalorder %v425, 0
    %vm478 = vcmp.ne.s32.totalorder %v432, 0
    %vm479 = vcmp.ne.s32.totalorder %v439, 0
    %vm480 = vcmp.ne.s32.totalorder %v446, 0
    %vm481 = vcmp.ne.s32.totalorder %v453, 0
    %vm482 = vcmp.ne.s32.totalorder %v460, 0
    %vm483 = vcmp.ne.s32.totalorder %v467, 0
    %vm484 = vcmp.lt.s32.totalorder %v362, 0
    %vm485 = vcmp.lt.s32.totalorder %v369, 0
    %vm486 = vcmp.lt.s32.totalorder %v376, 0
    %vm487 = vcmp.lt.s32.totalorder %v383, 0
    %vm488 = vcmp.lt.s32.totalorder %v390, 0
    %vm489 = vcmp.lt.s32.totalorder %v397, 0
    %vm490 = vcmp.lt.s32.totalorder %v404, 0
    %vm491 = vcmp.lt.s32.totalorder %v411, 0
    %vm492 = vcmp.lt.s32.totalorder %v418, 0
    %vm493 = vcmp.lt.s32.totalorder %v425, 0
    %vm494 = vcmp.lt.s32.totalorder %v432, 0
    %vm495 = vcmp.lt.s32.totalorder %v439, 0
    %vm496 = vcmp.lt.s32.totalorder %v446, 0
    %vm497 = vcmp.lt.s32.totalorder %v453, 0
    %vm498 = vcmp.lt.s32.totalorder %v460, 0
    %vm499 = vcmp.lt.s32.totalorder %v467, 0
    %vm500 = vmand %vm484, %vm468
    %vm501 = vmand %vm485, %vm469
    %vm502 = vmand %vm486, %vm470
    %vm503 = vmand %vm487, %vm471
    %vm504 = vmand %vm488, %vm472
    %vm505 = vmand %vm489, %vm473
    %vm506 = vmand %vm490, %vm474
    %vm507 = vmand %vm491, %vm475
    %vm508 = vmand %vm492, %vm476
    %vm509 = vmand %vm493, %vm477
    %vm510 = vmand %vm494, %vm478
    %vm511 = vmand %vm495, %vm479
    %vm512 = vmand %vm496, %vm480
    %vm513 = vmand %vm497, %vm481
    %vm514 = vmand %vm498, %vm482
    %vm515 = vmand %vm499, %vm483
    %v516 = vadd.s32 %v362, 8
    %v517 = vadd.s32 %v369, 8
    %v518 = vadd.s32 %v376, 8
    %v519 = vadd.s32 %v383, 8
    %v520 = vadd.s32 %v390, 8
    %v521 = vadd.s32 %v397, 8
    %v522 = vadd.s32 %v404, 8
    %v523 = vadd.s32 %v411, 8
    %v524 = vadd.s32 %v418, 8
    %v525 = vadd.s32 %v425, 8
    %v526 = vadd.s32 %v432, 8
    %v527 = vadd.s32 %v439, 8
    %v528 = vadd.s32 %v446, 8
    %v529 = vadd.s32 %v453, 8
    %v530 = vadd.s32 %v460, 8
    %v531 = vadd.s32 %v467, 8
    %v532 = vsel %vm500, %v516, %v362
    %v533 = vsel %vm501, %v517, %v369
    %v534 = vsel %vm502, %v518, %v376
    %v535 = vsel %vm503, %v519, %v383
    %v536 = vsel %vm504, %v520, %v390
    %v537 = vsel %vm505, %v521, %v397
    %v538 = vsel %vm506, %v522, %v404
    %v539 = vsel %vm507, %v523, %v411
    %v540 = vsel %vm508, %v524, %v418
    %v541 = vsel %vm509, %v525, %v425
    %v542 = vsel %vm510, %v526, %v432
    %v543 = vsel %vm511, %v527, %v439
    %v544 = vsel %vm512, %v528, %v446
    %v545 = vsel %vm513, %v529, %v453
    %v546 = vsel %vm514, %v530, %v460
    %v547 = vsel %vm515, %v531, %v467
    %vm548 = vcmp.eq.s32.totalorder %v532, %v355
    %vm549 = vcmp.eq.s32.totalorder %v533, %v355
    %vm550 = vcmp.eq.s32.totalorder %v534, %v355
    %vm551 = vcmp.eq.s32.totalorder %v535, %v355
    %vm552 = vcmp.eq.s32.totalorder %v536, %v355
    %vm553 = vcmp.eq.s32.totalorder %v537, %v355
    %vm554 = vcmp.eq.s32.totalorder %v538, %v355
    %vm555 = vcmp.eq.s32.totalorder %v539, %v355
    %vm556 = vcmp.eq.s32.totalorder %v540, %v355
    %vm557 = vcmp.eq.s32.totalorder %v541, %v355
    %vm558 = vcmp.eq.s32.totalorder %v542, %v355
    %vm559 = vcmp.eq.s32.totalorder %v543, %v355
    %vm560 = vcmp.eq.s32.totalorder %v544, %v355
    %vm561 = vcmp.eq.s32.totalorder %v545, %v355
    %vm562 = vcmp.eq.s32.totalorder %v546, %v355
    %vm563 = vcmp.eq.s32.totalorder %v547, %v355
    %v564 = vsel %vm548, 1, 0
    %v565 = vsel %vm549, 1, 0
    %v566 = vsel %vm550, 1, 0
    %v567 = vsel %vm551, 1, 0
    %v568 = vsel %vm552, 1, 0
    %v569 = vsel %vm553, 1, 0
    %v570 = vsel %vm554, 1, 0
    %v571 = vsel %vm555, 1, 0
    %v572 = vsel %vm556, 1, 0
    %v573 = vsel %vm557, 1, 0
    %v574 = vsel %vm558, 1, 0
    %v575 = vsel %vm559, 1, 0
    %v576 = vsel %vm560, 1, 0
    %v577 = vsel %vm561, 1, 0
    %v578 = vsel %vm562, 1, 0
    %v579 = vsel %vm563, 1, 0
    %v580 = vcvt.s32.f32 %v564
    %v581 = vcvt.s32.f32 %v565
    %v582 = vcvt.s32.f32 %v566
    %v583 = vcvt.s32.f32 %v567
    %v584 = vcvt.s32.f32 %v568
    %v585 = vcvt.s32.f32 %v569
    %v586 = vcvt.s32.f32 %v570
    %v587 = vcvt.s32.f32 %v571
    %v588 = vcvt.s32.f32 %v572
    %v589 = vcvt.s32.f32 %v573
    %v590 = vcvt.s32.f32 %v574
    %v591 = vcvt.s32.f32 %v575
    %v592 = vcvt.s32.f32 %v576
    %v593 = vcvt.s32.f32 %v577
    %v594 = vcvt.s32.f32 %v578
    %v595 = vcvt.s32.f32 %v579
    %vm596 = vcmp.lt.s32.totalorder %v355, 0
    %v597 = vsub.s32 0, %v355
    %v598 = vsel %vm596, %v597, %v355
    %v599 = vshrl.u32 %v598, 3
    %v600 = vand.u32 %v598, 7
    %v601 = vsub.s32 0, %v600
    %v602 = vsel %vm596, %v601, %v600
    %vm603 = vcmp.ne.s32.totalorder %v602, 0
    %vm604 = vcmp.lt.s32.totalorder %v602, 0
    %vm605 = vmand %vm604, %vm603
    %v606 = vadd.s32 %v602, 8
    %v607 = vsel %vm605, %v606, %v602
    %vm608 = vcmp.eq.s32.totalorder %v607, %v338
    %v609 = vsel %vm608, 1, 0
    %v610 = vcvt.s32.f32 %v609
    %v611 = vadd.f32 %v333, %v334
    %v612 = vadd.f32 %v611, %v335
    %v613 = vadd.f32 %v612, %v336
    %v614 = vrot.slane %v613, 4
    %v615 = vadd.f32 %v613, %v614
    %v616 = vrot.slane %v615, 2
    %v617 = vadd.f32 %v615, %v616
    %v618 = vrot.slane %v617, 1
    %v619 = vadd.f32 %v617, %v618
    %v620 = vmul.f32 %v333, %v333
    %v621 = vmul.f32 %v334, %v334
    %v622 = vmul.f32 %v335, %v335
    %v623 = vmul.f32 %v336, %v336
    %v624 = vadd.f32 %v620, %v621
    %v625 = vadd.f32 %v624, %v622
    %v626 = vadd.f32 %v625, %v623
    %v627 = vrot.slane %v626, 4
    %v628 = vadd.f32 %v626, %v627
    %v629 = vrot.slane %v628, 2
    %v630 = vadd.f32 %v628, %v629
    %v631 = vrot.slane %v630, 1
    %v632 = vadd.f32 %v630, %v631
    %633 = vmatpush.msra.mxu0 %v595
    %634 = vmatpush.msra.mxu0 %v594
    %635 = vmatpush.msra.mxu0 %v593
    %636 = vmatpush.msra.mxu0 %v592
    %637 = vmatpush.msra.mxu0 %v591
    %638 = vmatpush.msra.mxu0 %v590
    %639 = vmatpush.msra.mxu0 %v589
    %640 = vmatpush.msra.mxu0 %v588
    %641 = vmatpush.msra.mxu0 %v587
    %642 = vmatpush.msra.mxu0 %v586
    %643 = vmatpush.msra.mxu0 %v585
    %644 = vmatpush.msra.mxu0 %v584
    %645 = vmatpush.msra.mxu0 %v583
    %646 = vmatpush.msra.mxu0 %v582
    %647 = vmatpush.msra.mxu0 %v581
    %648 = vmatpush.msra.mxu0 %v580
    %649 = vmatmul.f32.gmra.mxu0 %v619
    %v650 = vpop.f32.mrf.mxu0
    %v651 = vadd.f32 0.0, %v650
    %652 = vdwg.mxu0
    %v653 = vmul.f32 %v651, 0.001953125
    %654 = vmatpush.msra.mxu0 %v595
    %655 = vmatpush.msra.mxu0 %v594
    %656 = vmatpush.msra.mxu0 %v593
    %657 = vmatpush.msra.mxu0 %v592
    %658 = vmatpush.msra.mxu0 %v591
    %659 = vmatpush.msra.mxu0 %v590
    %660 = vmatpush.msra.mxu0 %v589
    %661 = vmatpush.msra.mxu0 %v588
    %662 = vmatpush.msra.mxu0 %v587
    %663 = vmatpush.msra.mxu0 %v586
    %664 = vmatpush.msra.mxu0 %v585
    %665 = vmatpush.msra.mxu0 %v584
    %666 = vmatpush.msra.mxu0 %v583
    %667 = vmatpush.msra.mxu0 %v582
    %668 = vmatpush.msra.mxu0 %v581
    %669 = vmatpush.msra.mxu0 %v580
    %670 = vmatmul.f32.gmra.mxu0 %v632
    %v671 = vpop.f32.mrf.mxu0
    %v672 = vadd.f32 0.0, %v671
    %673 = vdwg.mxu0
    %v674 = vmul.f32 %v672, 0.001953125
    %v675 = vmul.f32 %v653, %v653
    %v676 = vsub.f32 %v674, %v675
    %v677 = vmax.f32 %v676, 0.0
    %v678 = vadd.f32 %v677, 1e-05
    %v679 = vrsqrt.pop %v678
    %v680 = vmul.f32 %v679, %v678
    %v681 = vmul.f32 %v680, %v679
    %v682 = vmul.f32 0.5, %v681
    %v683 = vsub.f32 1.5, %v682
    %v684 = vmul.f32 %v679, %v683
    %vm685 = vweird.f32 %v678
    %vm686 = vweird.f32 %v679
    %vm687 = vmor %vm685, %vm686
    %v688 = vsel %vm687, %v679, %v684
    %v689 = vld [vmem:[%s2] sm:$0x1]
    %v690 = vmul.f32 %v689, %v688
    %v691 = vld [vmem:[%s3] sm:$0x1]
    %v692 = vmul.f32 %v653, %v690
    %v693 = vsub.f32 %v691, %v692
    %vm694 = vcmask 64512
    %v696 = vsel %vm694, %v690, 0
    %698 = vmatpush.msra.mxu0 0.0
    %699 = vmatpush.msra.mxu0 0.0
    %700 = vmatpush.msra.mxu0 0.0
    %701 = vmatpush.msra.mxu0 0.0
    %702 = vmatpush.msra.mxu0 0.0
    %703 = vmatpush.msra.mxu0 0.0
    %704 = vmatpush.msra.mxu0 0.0
    %705 = vmatpush.msra.mxu0 0.0
    %706 = vmatpush.msra.mxu0 0.0
    %707 = vmatpush.msra.mxu0 0.0
    %708 = vmatpush.msra.mxu0 0.0
    %709 = vmatpush.msra.mxu0 0.0
    %710 = vmatpush.msra.mxu0 0.0
    %711 = vmatpush.msra.mxu0 0.0
    %712 = vmatpush.msra.mxu0 0.0
    %713 = vmatpush.msra.mxu0 %v610
    %714 = vmatmul.f32.gmra.mxu0 %v696
    %v715 = vpop.f32.mrf.mxu0
    %v716 = vadd.f32 0.0, %v715
    %717 = vdwg.mxu0
    %v719 = vsel %vm694, %v693, 0
    %721 = vmatpush.msra.mxu0 0.0
    %722 = vmatpush.msra.mxu0 0.0
    %723 = vmatpush.msra.mxu0 0.0
    %724 = vmatpush.msra.mxu0 0.0
    %725 = vmatpush.msra.mxu0 0.0
    %726 = vmatpush.msra.mxu0 0.0
    %727 = vmatpush.msra.mxu0 0.0
    %728 = vmatpush.msra.mxu0 0.0
    %729 = vmatpush.msra.mxu0 0.0
    %730 = vmatpush.msra.mxu0 0.0
    %731 = vmatpush.msra.mxu0 0.0
    %732 = vmatpush.msra.mxu0 0.0
    %733 = vmatpush.msra.mxu0 0.0
    %734 = vmatpush.msra.mxu0 0.0
    %735 = vmatpush.msra.mxu0 0.0
    %736 = vmatpush.msra.mxu0 %v610
    %737 = vmatmul.f32.gmra.mxu0 %v719
    %v738 = vpop.f32.mrf.mxu0
    %v739 = vadd.f32 0.0, %v738
    %740 = vdwg.mxu0
    %v741 = vperm.slane %v716, 0
    %v742 = vmul.f32 %v333, %v741
    %v743 = vmul.f32 %v334, %v741
    %v744 = vmul.f32 %v335, %v741
    %v745 = vmul.f32 %v336, %v741
    %v746 = vperm.slane %v739, 0
    %v747 = vadd.f32 %v742, %v746
    %v748 = vadd.f32 %v743, %v746
    %v749 = vadd.f32 %v744, %v746
    %v750 = vadd.f32 %v745, %v746
    %751 = vst [vmem:[#allocation5] sm:$0xff] %v747
    %752 = vst [vmem:[#allocation5 + $0x8] sm:$0xff] %v748
    %753 = vst [vmem:[#allocation5 + $0x10] sm:$0xff] %v749
    %754 = vst [vmem:[#allocation5 + $0x18] sm:$0xff] %v750
    // Predicated region
    $region22: #{tpu_custom_call.1} parent=1 // pred_check
      _
    $region23: #{tpu_custom_call.1} parent=1 // pred_check_branch
      %756 = sbr.rel (0) target = $region25
    $region24: #{tpu_custom_call.1} parent=1 // pred_region
      %758 = vsyncadd [#allocation4], 0
      %s759 = sshll.u32 [#allocation5], 4
      %s760 = int_to_ptr.vmem [resolvable:$true] %s759
      %s761 = sshll.u32 %s4, 4
      %s762 = int_to_ptr.hbm [resolvable:$true] %s761
      %767 = dma.vmem_to_hbm [thread:$0]  %s760, 512, %s762, [#allocation4], 128, 128, 8
    $region25: #{tpu_custom_call.1} parent=1 // pred_fallthru
      _
    // Predicated region
    $region26: #{tpu_custom_call.1} parent=1 // pred_check
      _
    $region27: #{tpu_custom_call.1} parent=1 // pred_check_branch
      %769 = sbr.rel (0) target = $region29
    $region28: #{tpu_custom_call.1} parent=1 // pred_region
      %771 = dma.done [#allocation4], 512
    $region29: #{tpu_custom_call.1} parent=1 // pred_fallthru
      _
    %772 = vsyncpa [#allocation3], 1
    %773 = vsyncpa [#allocation4], 1

</llo_original>
